<compile_context>
chip_gen: v7x
topology: tpu7x:2x2x1
jax: 0.10.0
libtpu: 0.0.40
codegen_flags: <defaults>
</compile_context>

<pallas_src>
import functools
import math

import jax
import jax.numpy as jnp
from jax.experimental import pallas as pl
from jax.experimental.pallas import tpu as pltpu


# ---------------------------------------------------------------------------
# Kernels
# ---------------------------------------------------------------------------

def _compute_dtype(dtype):
    # f32 op-math for sub-32-bit float inputs (matches PyTorch; free, mem-bound).
    return jnp.float32 if jnp.dtype(dtype).itemsize < 4 else dtype


def _glu_split_kernel(a_ref, b_ref, o_ref):
    # a/b/out blocks have identical shapes (rank-agnostic elementwise body).
    cdt = _compute_dtype(a_ref.dtype)
    a = a_ref[...].astype(cdt)
    b = b_ref[...].astype(cdt)
    o_ref[...] = (a * jax.nn.sigmoid(b)).astype(o_ref.dtype)


def _glu_fused_lastdim_kernel(x_ref, o_ref):
    # Fallback: x_ref carries the full (a|b) row; split in-kernel along lanes.
    cdt = _compute_dtype(x_ref.dtype)
    half = o_ref.shape[-1]
    a = x_ref[:, :half].astype(cdt)
    b = x_ref[:, half:].astype(cdt)
    o_ref[...] = (a * jax.nn.sigmoid(b)).astype(o_ref.dtype)


# ---------------------------------------------------------------------------
# Tiling helpers
# ---------------------------------------------------------------------------

_MAX_TILE_ROWS = 2048


@functools.lru_cache(maxsize=1)
def _device_budget():
    """(double-buffered block budget bytes, vmem_limit_bytes) per generation."""
    mib = 1024 * 1024
    kind = ""
    try:
        kind = jax.devices()[0].device_kind.lower()
    except Exception:
        pass
    if "v6" in kind:                         # v6e: 128 MiB physical VMEM
        return 24 * mib, 48 * mib
    if "v7" in kind or "7x" in kind:         # v7x: 64 MiB physical VMEM, 3.2 TB/s HBM
        return 20 * mib, 40 * mib
    if "v5 lite" in kind or "v5e" in kind or "v5lite" in kind:
        return 8 * mib, 20 * mib             # v5e: stay near its 16 MiB scoped default
    return 8 * mib, 24 * mib                 # unknown / older: conservative


def _min_sublane(dtype) -> int:
    # Sublane tile multiple per element size: f32->8, bf16->16, i8->32.
    itemsize = jnp.dtype(dtype).itemsize
    return {4: 8, 2: 16, 1: 32}.get(itemsize, 8)


def _target_blocks(out_bytes: int) -> int:
    # Enough grid steps to feed both v7x TensorCores ("parallel" axes shard
    # across TCs) while keeping the ~0.35us per-step overhead negligible.
    if out_bytes >= 8 * 1024 * 1024:
        return 8
    if out_bytes >= 1 * 1024 * 1024:
        return 2
    return 1


def _largest_divisor_leq(n: int, cap: int) -> int:
    cap = max(1, min(n, cap))
    for d in range(cap, 0, -1):
        if n % d == 0:
            return d
    return 1


def _pick_col_tile(half, itemsize, sub, budget):
    # Prefer one full-half-width block: contiguous output writeback, long-run
    # strided a/b reads, fewest grid steps.
    if 6 * sub * half * itemsize <= budget:
        return half
    # Extremely wide half: largest 128-multiple divisor that still fits a
    # minimum-height block in the budget.
    ncols = half // 128
    cap = budget // (6 * sub * 128 * itemsize)
    return 128 * _largest_divisor_leq(ncols, cap)


def _pick_row_tile(rows, bytes_per_row, dtype, budget, target_blocks):
    """Rows per block: sublane multiple, VMEM-budgeted, and small enough to
    leave >= target_blocks grid steps on the parallel row axis."""
    sub = _min_sublane(dtype)
    tr = budget // max(bytes_per_row, 1)
    tr = max(sub, (tr // sub) * sub)
    tr = min(tr, _MAX_TILE_ROWS)
    if target_blocks > 1 and rows > sub:
        tr_par = pl.cdiv(pl.cdiv(rows, target_blocks), sub) * sub
        tr = min(tr, max(tr_par, sub))
    return rows if tr >= rows else tr


# ---------------------------------------------------------------------------
# Trailing-dim path (2-D)
# ---------------------------------------------------------------------------

def _glu_lastdim(x2d, half, budget, vmem_limit):
    rows, size = x2d.shape
    dtype = x2d.dtype
    itemsize = jnp.dtype(dtype).itemsize
    sub = _min_sublane(dtype)
    target = _target_blocks(rows * half * itemsize)

    if half % 128 == 0:
        # Lane-aligned fast path: a/b delivered by two BlockSpecs on the same
        # input (no in-kernel split / relayout).
        tc = _pick_col_tile(half, itemsize, sub, budget)
        col_blocks = half // tc
        tr = _pick_row_tile(rows, 6 * tc * itemsize, dtype, budget,
                            max(1, target // col_blocks))
        grid = (pl.cdiv(rows, tr), col_blocks)
        return pl.pallas_call(
            _glu_split_kernel,
            out_shape=jax.ShapeDtypeStruct((rows, half), dtype),
            grid_spec=pltpu.PrefetchScalarGridSpec(
                num_scalar_prefetch=0,
                grid=grid,
                in_specs=[
                    # a half: columns [0, half)
                    pl.BlockSpec((tr, tc), lambda i, j: (i, j)),
                    # b half: columns [half, 2*half) -> shift by col_blocks blocks
                    pl.BlockSpec((tr, tc), lambda i, j: (i, j + col_blocks)),
                ],
                out_specs=pl.BlockSpec((tr, tc), lambda i, j: (i, j)),
            ),
            compiler_params=pltpu.CompilerParams(
                dimension_semantics=("parallel", "parallel"),
                vmem_limit_bytes=vmem_limit),
        )(x2d, x2d)

    # Unaligned half: one block spans the full (a|b) row, split in-kernel.
    tr = _pick_row_tile(rows, 6 * half * itemsize, dtype, budget, target)
    grid = (pl.cdiv(rows, tr),)
    return pl.pallas_call(
        _glu_fused_lastdim_kernel,
        out_shape=jax.ShapeDtypeStruct((rows, half), dtype),
        grid_spec=pltpu.PrefetchScalarGridSpec(
            num_scalar_prefetch=0,
            grid=grid,
            in_specs=[pl.BlockSpec((tr, size), lambda i: (i, 0))],
            out_specs=pl.BlockSpec((tr, half), lambda i: (i, 0)),
        ),
        compiler_params=pltpu.CompilerParams(
            dimension_semantics=("parallel",),
            vmem_limit_bytes=vmem_limit),
    )(x2d)


# ---------------------------------------------------------------------------
# Non-trailing gated dim, sublane-aligned half: no HBM transpose (3-D)
# ---------------------------------------------------------------------------

def _glu_mid_split(x3d, half, post, budget, vmem_limit):
    pre = x3d.shape[0]
    dtype = x3d.dtype
    itemsize = jnp.dtype(dtype).itemsize
    sub = _min_sublane(dtype)

    # Lane tile over `post`: full-dim block if a minimum-height block fits,
    # otherwise 128-multiples (ragged last block handled by cdiv).
    if post <= 128 or 6 * sub * post * itemsize <= budget:
        tp = post
    else:
        tp = max(128, (budget // (6 * sub * itemsize) // 128) * 128)
        tp = min(tp, (post // 128) * 128)
    post_blocks = pl.cdiv(post, tp)

    target = _target_blocks(pre * half * post * itemsize)

    # Gate-axis tile: divisor of `half` in sublane units, budget-limited; only
    # shrink further if `pre`/`post` blocks can't supply the parallel target.
    n_sub = half // sub
    cap_fit = max(1, budget // (6 * sub * tp * itemsize))
    cap_par = n_sub
    if pre * post_blocks < target:
        need_gate = pl.cdiv(target, max(1, pre * post_blocks))
        cap_par = max(1, n_sub // need_gate)
    th = sub * _largest_divisor_leq(n_sub, min(cap_fit, cap_par))
    gate_blocks = half // th

    # Pre-axis tile: soak up the remaining budget but keep >= target grid steps.
    bp = max(1, min(pre, budget // (6 * th * tp * itemsize)))
    bp = min(bp, max(1, pl.cdiv(pre, min(pre, target))))
    grid = (pl.cdiv(pre, bp), gate_blocks, post_blocks)

    return pl.pallas_call(
        _glu_split_kernel,
        out_shape=jax.ShapeDtypeStruct((pre, half, post), dtype),
        grid_spec=pltpu.PrefetchScalarGridSpec(
            num_scalar_prefetch=0,
            grid=grid,
            in_specs=[
                # a half: gated rows [0, half)
                pl.BlockSpec((bp, th, tp), lambda p, i, j: (p, i, j)),
                # b half: gated rows [half, 2*half) -> shift by gate_blocks blocks
                pl.BlockSpec((bp, th, tp),
                             lambda p, i, j: (p, i + gate_blocks, j)),
            ],
            out_specs=pl.BlockSpec((bp, th, tp), lambda p, i, j: (p, i, j)),
        ),
        compiler_params=pltpu.CompilerParams(
            dimension_semantics=("parallel", "parallel", "parallel"),
            vmem_limit_bytes=vmem_limit),
    )(x3d, x3d)


# ---------------------------------------------------------------------------
# Wrapper
# ---------------------------------------------------------------------------

def glu_pallas(x, dim=-1):
    """GLU along `dim` (torch GLU semantics), computed with a Pallas TPU kernel."""
    ndim = x.ndim
    dim = dim % ndim
    size = x.shape[dim]
    if size % 2 != 0:
        raise ValueError("GLU dim size must be even")
    half = size // 2

    budget, vmem_limit = _device_budget()
    sub = _min_sublane(x.dtype)

    if dim == ndim - 1:
        lead = x.shape[:-1]
        rows = int(math.prod(lead)) if lead else 1
        out2d = _glu_lastdim(x.reshape(rows, size), half, budget, vmem_limit)
        return out2d.reshape(*lead, half)

    if half % sub == 0:
        # No-transpose path: keep the original trailing axes as the lane dim,
        # split a/b along the gated (sublane) axis via block-index offsets.
        pre = int(math.prod(x.shape[:dim])) if dim else 1
        post = int(math.prod(x.shape[dim + 1:]))
        out3d = _glu_mid_split(x.reshape(pre, size, post), half, post,
                               budget, vmem_limit)
        return out3d.reshape(*x.shape[:dim], half, *x.shape[dim + 1:])

    # TODO(synk): sublane-unaligned `half` on a non-trailing dim still pays an
    # HBM transpose (moveaxis); a fused sublane-split kernel could avoid it.
    x_moved = jnp.moveaxis(x, dim, -1)
    lead = x_moved.shape[:-1]
    rows = int(math.prod(lead)) if lead else 1
    out2d = _glu_lastdim(x_moved.reshape(rows, size), half, budget, vmem_limit)
    return jnp.moveaxis(out2d.reshape(*lead, half), -1, dim)


def glu_ref(x, dim=-1):
    a, b = jnp.split(x, 2, axis=dim)
    return a * jax.nn.sigmoid(b)


# ---------------------------------------------------------------------------
# Self-test
# ---------------------------------------------------------------------------

if __name__ == "__main__":
    key = jax.random.PRNGKey(0)
    k1, k2, k3, k4, k5 = jax.random.split(key, 5)

    # 1) Small MyGLU(dim=-1) shape (batch=2, seq=8, hidden=32): half=16 ->
    #    fused in-kernel split path.
    x_small = jax.random.normal(k1, (2, 8, 32), dtype=jnp.float32)
    y_small = jax.block_until_ready(glu_pallas(x_small, dim=-1))
    assert y_small.shape == (2, 8, 16)
    assert jnp.allclose(y_small, glu_ref(x_small, -1), atol=1e-6, rtol=1e-6)

    # 2) Lane-aligned width -> fast path with a single full-half-width column
    #    block (tc = half = 1152), b blocks offset by one column block.
    x_aligned = jax.random.normal(k2, (2, 64, 2304), dtype=jnp.float32)
    y_aligned = jax.block_until_ready(glu_pallas(x_aligned, dim=-1))
    assert y_aligned.shape == (2, 64, 1152)
    assert jnp.allclose(y_aligned, glu_ref(x_aligned, -1), atol=1e-6, rtol=1e-6)

    # 3) Non-trailing gated dim, sublane-UNaligned half (5) -> moveaxis fallback.
    x_dim1 = jax.random.normal(k3, (3, 10, 48), dtype=jnp.float32)
    y_dim1 = jax.block_until_ready(glu_pallas(x_dim1, dim=1))
    assert y_dim1.shape == (3, 5, 48)
    assert jnp.allclose(y_dim1, glu_ref(x_dim1, 1), atol=1e-6, rtol=1e-6)

    # 4) Non-trailing gated dim, sublane-aligned half (128) -> no-transpose
    #    3-D split path (a/b offset along the gated sublane axis).
    x_dim1a = jax.random.normal(k5, (2, 256, 96), dtype=jnp.float32)
    y_dim1a = jax.block_until_ready(glu_pallas(x_dim1a, dim=1))
    assert y_dim1a.shape == (2, 128, 96)
    assert jnp.allclose(y_dim1a, glu_ref(x_dim1a, 1), atol=1e-6, rtol=1e-6)

    # 5) bf16 input -> fast path, f32 op-math inside the kernel.
    x_bf16 = jax.random.normal(k4, (4, 32, 256), dtype=jnp.bfloat16)
    y_bf16 = jax.block_until_ready(glu_pallas(x_bf16, dim=-1))
    y_bf16_ref = glu_ref(x_bf16.astype(jnp.float32), -1)
    assert y_bf16.shape == (4, 32, 128)
    assert jnp.allclose(y_bf16.astype(jnp.float32), y_bf16_ref,
                        atol=3e-2, rtol=3e-2)

    print("KERNEL_OK")
</pallas_src>

<mosaic_0001>
module attributes {stable_mosaic.version = 11 : i64} {
  func.func @_glu_fused_lastdim_kernel(%arg0: i32, %arg1: memref<16x32xf32, #tpu.memory_space<vmem>>, %arg2: memref<16x16xf32, #tpu.memory_space<vmem>>) attributes {dimension_semantics = [#tpu.dimension_semantics<parallel>], iteration_bounds = array<i64: 1>, scalar_prefetch = 0 : i64, scratch_operands = 0 : i64, tpu.core_type = #tpu.core_type<tc>, window_params = [{transform_indices = @transform_0, window_bounds = array<i64: 16, 32>}, {transform_indices = @transform_1, window_bounds = array<i64: 16, 16>}]} {
    %c0 = arith.constant 0 : index
    %c0_0 = arith.constant 0 : index
    %0 = vector.load %arg1[%c0, %c0_0] : memref<16x32xf32, #tpu.memory_space<vmem>>, vector<16x16xf32>
    %c0_1 = arith.constant 0 : index
    %c16 = arith.constant 16 : index
    %1 = vector.load %arg1[%c0_1, %c16] : memref<16x32xf32, #tpu.memory_space<vmem>>, vector<16x16xf32>
    %2 = arith.negf %1 : vector<16x16xf32>
    %3 = math.exp %2 : vector<16x16xf32>
    %cst = arith.constant 1.000000e+00 : f32
    %4 = vector.broadcast %cst : f32 to vector<16x16xf32>
    %5 = arith.addf %4, %3 : vector<16x16xf32>
    %6 = arith.divf %4, %5 : vector<16x16xf32>
    %7 = arith.mulf %0, %6 : vector<16x16xf32>
    %c0_2 = arith.constant 0 : index
    %c0_3 = arith.constant 0 : index
    %8 = vector.load %arg2[%c0_2, %c0_3] : memref<16x16xf32, #tpu.memory_space<vmem>>, vector<16x16xf32>
    tpu.vector_store %arg2[%c0_2, %c0_3], %7 {strides = array<i32>} : memref<16x16xf32, #tpu.memory_space<vmem>>, vector<16x16xf32>,
    return
  }
  func.func @transform_0(%arg0: i32) -> (i32, i32) {
    %c0_i32 = arith.constant 0 : i32
    %c0_i32_0 = arith.constant 0 : i32
    return %arg0, %c0_i32 : i32, i32
  }
  func.func @transform_1(%arg0: i32) -> (i32, i32) {
    %c0_i32 = arith.constant 0 : i32
    %c0_i32_0 = arith.constant 0 : i32
    return %arg0, %c0_i32 : i32, i32
  }
}

</mosaic_0001>

<llo_original>
// kernel: tpu_custom_call.1
$region0: #{tpu_custom_call.1}
  #allocation0 [shape = 'u32[]', space=smem, size = 0x4, offset = 0x4, fixed_abs, tag = 'smem constant byte address 0x4 - core index']
  #allocation1 [shape = 'u32[144,128]{1,0:T(1,128)}', space=vmem, size = 0x12000, scoped, tag = 'internal scratch']
  %s0 = inlined_call_operand.hbm [shape: f32[16,32], index: 0, kind: input, shape index: {}]
  %s1 = inlined_call_operand.hbm [shape: f32[16,16], index: 1, kind: output, shape index: {}]
  %s2 = sld [smem:[#allocation0]]
  $region18: #{tpu_custom_call.1} parent=0
    _
  %s4 = ssub.s32 1, %s2
  %s5 = scalar_select 0, %s4, %s2
  $region1: #{tpu_custom_call.1} parent=0
    #allocation2 [shape = 'u8[8192]{0}', space=vmem, size = 0x2000, scoped, tag = 'input window, operand 0, single buffered']
    #allocation3 [shape = 's32[1]{0}', space=sflag, size = 0x4, scoped, tag = 'scoped memory for tpu_custom_call.1']
    #allocation4 [shape = 's32[1]{0}', space=sflag, size = 0x4, scoped, tag = 'scoped memory for tpu_custom_call.1']
    #allocation5 [shape = 'u8[8192]{0}', space=vmem, size = 0x2000, scoped, tag = 'output window, operand 0, single buffered']
    %6 = vsyncpa [#allocation3], 0
    %7 = vsyncpa [#allocation4], 0
    // Predicated region
    $region2: #{tpu_custom_call.1} parent=1 // pred_check
      _
    $region3: #{tpu_custom_call.1} parent=1 // pred_check_branch
      %9 = sbr.rel (0) target = $region5
    $region4: #{tpu_custom_call.1} parent=1 // pred_region
      %s11 = ssub.s32 256, 256
      %12 = vsyncadd [#allocation3], %s11
      %s13 = sshll.u32 [#allocation2], 4
      %s14 = int_to_ptr.vmem [resolvable:$true] %s13
      %19 = dma.hbm_to_vmem [thread:$0]  %s0, 256, %s14, [#allocation3], 128, 128, 8
    $region5: #{tpu_custom_call.1} parent=1 // pred_fallthru
      _
    // Predicated region
    $region6: #{tpu_custom_call.1} parent=1 // pred_check
      _
    $region7: #{tpu_custom_call.1} parent=1 // pred_check_branch
      %21 = sbr.rel (0) target = $region9
    $region8: #{tpu_custom_call.1} parent=1 // pred_region
      %22 = dma.done [#allocation3], 256
    $region9: #{tpu_custom_call.1} parent=1 // pred_fallthru
      _
    %v23 = vld [vmem:[#allocation2] sm:$0xff]
    %v24 = vld [vmem:[#allocation2 + $0x8] sm:$0xff]
    %v25 = vxor.u32 %v23, 2147483648
    %v26 = vxor.u32 %v24, 2147483648
    %v27 = vmul.f32 %v25, 1.442695
    %v28 = vpow.pop %v27
    %v29 = vmul.f32 %v26, 1.442695
    %v30 = vpow.pop %v29
    %v31 = vadd.f32 %v28, 1.0
    %v32 = vadd.f32 %v30, 1.0
    %v33 = vrcp.pop %v31
    %v34 = vmul.f32 1.0, %v33
    %v35 = vrcp.pop %v32
    %v36 = vmul.f32 1.0, %v35
    %39 = vrot.lane.b32.xlu0 %v34, 112
    %v40 = vpop.permute.xlu0 %39
    %41 = vrot.lane.b32.xlu0 %v36, 112
    %v42 = vpop.permute.xlu0 %41
    %v45 = vmul.f32 %v23, %v40
    %v46 = vmul.f32 %v24, %v42
    %vm47 = vcmask 130048
    %48 = vst.msk [vmem:[#allocation5] sm:$0xff] %vm47, %v45
    %49 = vst.msk [vmem:[#allocation5 + $0x8] sm:$0xff] %vm47, %v46
    // Predicated region
    $region10: #{tpu_custom_call.1} parent=1 // pred_check
      _
    $region11: #{tpu_custom_call.1} parent=1 // pred_check_branch
      %51 = sbr.rel (0) target = $region13
    $region12: #{tpu_custom_call.1} parent=1 // pred_region
      %s53 = ssub.s32 256, 256
      %54 = vsyncadd [#allocation4], %s53
      %s55 = sshll.u32 [#allocation5], 4
      %s56 = int_to_ptr.vmem [resolvable:$true] %s55
      %61 = dma.vmem_to_hbm [thread:$0]  %s56, 256, %s1, [#allocation4], 128, 128, 8
    $region13: #{tpu_custom_call.1} parent=1 // pred_fallthru
      _
    // Predicated region
    $region14: #{tpu_custom_call.1} parent=1 // pred_check
      _
    $region15: #{tpu_custom_call.1} parent=1 // pred_check_branch
      %63 = sbr.rel (0) target = $region17
    $region16: #{tpu_custom_call.1} parent=1 // pred_region
      %64 = dma.done [#allocation4], 256
    $region17: #{tpu_custom_call.1} parent=1 // pred_fallthru
      _
    %65 = vsyncpa [#allocation3], 1
    %66 = vsyncpa [#allocation4], 1

</llo_original>
